<compile_context>
chip_gen: v6e
topology: v6e:2x2x1
jax: 0.10.0
libtpu: 0.0.40
codegen_flags: <defaults>
</compile_context>

<pallas_src>
import numpy as np

import jax
import jax.numpy as jnp
from jax.experimental import pallas as pl
from jax.experimental.pallas import tpu as pltpu

EPS = 1e-6  # GeMHPP eps


def _astp_kernel(x_ref, w_ref, pvec_ref, seg_ref, invp_ref, o_ref, xmax_ref):
    """Fused SP1 (temporal max) + 1x1 proj + per-split GeM pooling.

    x_ref    : VMEM [Nb, c_in, s_tile, hw]   (native layout, s tiled)
    w_ref    : VMEM [c_out, c_in]            (1x1 conv weight, no bias)
    pvec_ref : VMEM [1, hw]                  (per-lane GeM exponent p)
    seg_ref  : VMEM [hw, m]                  (segment-mean matrix, 1/split_elems)
    invp_ref : VMEM [1, m]                   (1/p per split)
    o_ref    : VMEM [Nb, c_out, m]
    xmax_ref : VMEM scratch [Nb, c_in, hw]   (running temporal max)
    """
    t = pl.program_id(1)

    # (1) Running temporal max over the tiled sequence axis (sublane reduce).
    blk_max = jnp.max(x_ref[...].astype(jnp.float32), axis=2)   # [Nb, c_in, hw]

    @pl.when(t == 0)
    def _():
        xmax_ref[...] = blk_max

    @pl.when(t != 0)
    def _():
        xmax_ref[...] = jnp.maximum(xmax_ref[...], blk_max)

    # (2)+(3) proj + GeM, only after the last sequence tile.
    @pl.when(t == pl.num_programs(1) - 1)
    def _():
        w = w_ref[...]                 # [c_out, c_in]
        pvec = pvec_ref[...]           # [1, hw]
        seg = seg_ref[...]             # [hw, m]
        invp = invp_ref[...]           # [1, m]
        nb = xmax_ref.shape[0]         # static
        cols = []
        for b in range(nb):            # static unroll; nb is small
            # 1x1 conv (bias-free) == plain matmul on the MXU.
            y = jnp.dot(w, xmax_ref[b],
                        preferred_element_type=jnp.float32)          # [c_out, hw]
            # GeM numerator: exactly one log + one exp per element (EUP),
            # no lane-boundary slicing.
            yp = jnp.exp(jnp.log(jnp.maximum(y, EPS)) * pvec)         # [c_out, hw]
            # All per-split means in a single matmul.
            pooled = jnp.dot(yp, seg,
                             preferred_element_type=jnp.float32)      # [c_out, m]
            # **(1/p) only on the tiny pooled result.
            cols.append(pooled ** invp)                               # [c_out, m]
        # One store of the whole (Nb, c_out, m) slab for this grid step.
        o_ref[...] = jnp.stack(cols, axis=0).astype(o_ref.dtype)


def _pick_batch_block(n, cap=8):
    """Largest divisor of n <= cap, keeping >=2 parallel blocks when n >= 2."""
    best = 1
    for d in range(1, min(n, cap) + 1):
        if n % d == 0 and (n < 2 or n // d >= 2):
            best = d
    return best


def _pick_seq_tile(s, nb, c_in, hw, bytes_per_elem,
                   budget_bytes=8 * 1024 * 1024):
    """Largest s tile (divisor of s, multiple of 8 or full s) within budget."""
    if nb * c_in * s * hw * bytes_per_elem <= budget_bytes:
        return s
    best = None
    for d in range(8, s, 8):
        if s % d == 0 and nb * c_in * d * hw * bytes_per_elem <= budget_bytes:
            best = d
    return best if best is not None else s


def astp_forward(x, weight, p, split_param, seqL=None):
    """x: [n, c_in, s, h, w] (PyTorch layout), weight: [c_out, c_in], p: [m]."""
    # TODO(synk): packed-sequence seqL handling (per-sequence segmented max) is
    # not implemented; seqL=None (max over the full sequence axis) only.
    assert seqL is None
    n, c_in, s, h, wd = x.shape
    c_out = weight.shape[0]
    m = len(split_param)
    assert sum(split_param) == h
    hw = h * wd

    # Native-layout reshape only: no transpose, no extra HBM pass.
    xk = x.reshape(n, c_in, s, hw)

    # Static split one-hot [hw, m]:
    #   seg  = one-hot / split_elems  -> one matmul performs all split means
    #   pvec = per-lane GeM exponent (p[i] broadcast over its split's lanes)
    onehot = np.zeros((hw, m), np.float32)
    sizes = []
    start = 0
    for i, hs in enumerate(split_param):
        size = hs * wd
        onehot[start:start + size, i] = 1.0
        sizes.append(size)
        start += size
    seg = jnp.asarray(onehot / np.asarray(sizes, np.float32))              # [hw, m]
    pvec = (jnp.asarray(onehot) @ p.astype(jnp.float32)).reshape(1, hw)    # [1, hw]
    invp = (1.0 / p.astype(jnp.float32)).reshape(1, m)                     # [1, m]

    nb = _pick_batch_block(n)
    bytes_per_elem = jnp.dtype(x.dtype).itemsize
    s_tile = _pick_seq_tile(s, nb, c_in, hw, bytes_per_elem)
    grid = (n // nb, s // s_tile)

    out = pl.pallas_call(
        _astp_kernel,
        out_shape=jax.ShapeDtypeStruct((n, c_out, m), jnp.float32),
        grid_spec=pltpu.PrefetchScalarGridSpec(
            num_scalar_prefetch=0,
            grid=grid,
            in_specs=[
                pl.BlockSpec((nb, c_in, s_tile, hw), lambda b, t: (b, 0, t, 0)),
                pl.BlockSpec((c_out, c_in), lambda b, t: (0, 0)),
                pl.BlockSpec((1, hw), lambda b, t: (0, 0)),
                pl.BlockSpec((hw, m), lambda b, t: (0, 0)),
                pl.BlockSpec((1, m), lambda b, t: (0, 0)),
            ],
            out_specs=pl.BlockSpec((nb, c_out, m), lambda b, t: (b, 0, 0)),
            scratch_shapes=[pltpu.VMEM((nb, c_in, hw), jnp.float32)],
        ),
        compiler_params=pltpu.CompilerParams(
            dimension_semantics=("parallel", "arbitrary")),
    )(xk, weight, pvec, seg, invp)
    return out


def astp_reference(x, weight, p, split_param):
    """Pure-JAX reference matching the PyTorch module."""
    xmax = jnp.max(x, axis=2)                              # [n, c_in, h, w]
    y = jnp.einsum("oc,nchw->nohw", weight, xmax)          # 1x1 conv, no bias
    outs = []
    start = 0
    for i, hs in enumerate(split_param):
        chunk = y[:, :, start:start + hs, :].reshape(y.shape[0], y.shape[1], -1)
        chunk = jnp.maximum(chunk, EPS)
        pooled = jnp.mean(chunk ** p[i], axis=-1) ** (1.0 / p[i])
        outs.append(pooled)
        start += hs
    return jnp.stack(outs, axis=-1)                        # [n, c_out, m]


if __name__ == "__main__":
    key = jax.random.PRNGKey(0)
    k_x, k_w = jax.random.split(key)

    # Small shapes consistent with the module's forward.
    n, c_in, s, h, wd = 2, 4, 8, 16, 16
    c_out = 8
    split_param = [4, 4, 8]          # sums to h; m = 3 parts
    m = len(split_param)

    x = jax.random.normal(k_x, (n, c_in, s, h, wd), dtype=jnp.float32)
    weight = 0.1 * jax.random.normal(k_w, (c_out, c_in), dtype=jnp.float32)
    # Each GeMHPP module owns its own p parameter, all initialized to 6.5.
    p = jnp.full((m,), 6.5, dtype=jnp.float32)

    out = astp_forward(x, weight, p, split_param)
    out = jax.block_until_ready(out)

    ref = astp_reference(x, weight, p, split_param)
    assert out.shape == (n, c_out, m), out.shape
    assert jnp.allclose(out, ref, atol=1e-4, rtol=1e-4), (
        "mismatch", float(jnp.max(jnp.abs(out - ref))))

    print("KERNEL_OK")
</pallas_src>

<mosaic_0001>
module attributes {stable_mosaic.version = 11 : i64} {
  func.func @_astp_kernel(%arg0: i32, %arg1: i32, %arg2: memref<1x4x8x256xf32, #tpu.memory_space<vmem>>, %arg3: memref<8x4xf32, #tpu.memory_space<vmem>>, %arg4: memref<1x256xf32, #tpu.memory_space<vmem>>, %arg5: memref<256x3xf32, #tpu.memory_space<vmem>>, %arg6: memref<1x3xf32, #tpu.memory_space<vmem>>, %arg7: memref<1x8x3xf32, #tpu.memory_space<vmem>>, %arg8: memref<1x4x256xf32, #tpu.memory_space<vmem>>) attributes {dimension_semantics = [#tpu.dimension_semantics<parallel>, #tpu.dimension_semantics<arbitrary>], iteration_bounds = array<i64: 2, 1>, scalar_prefetch = 0 : i64, scratch_operands = 1 : i64, tpu.core_type = #tpu.core_type<tc>, window_params = [{transform_indices = @transform_0, window_bounds = array<i64: 1, 4, 8, 256>}, {pipeline_mode = #tpu.pipeline_mode<synchronous>, transform_indices = @transform_1, window_bounds = array<i64: 8, 4>}, {pipeline_mode = #tpu.pipeline_mode<synchronous>, transform_indices = @transform_2, window_bounds = array<i64: 1, 256>}, {pipeline_mode = #tpu.pipeline_mode<synchronous>, transform_indices = @transform_3, window_bounds = array<i64: 256, 3>}, {pipeline_mode = #tpu.pipeline_mode<synchronous>, transform_indices = @transform_4, window_bounds = array<i64: 1, 3>}, {transform_indices = @transform_5, window_bounds = array<i64: 1, 8, 3>}]} {
    %c0 = arith.constant 0 : index
    %c0_0 = arith.constant 0 : index
    %c0_1 = arith.constant 0 : index
    %c0_2 = arith.constant 0 : index
    %0 = vector.load %arg2[%c0, %c0_0, %c0_1, %c0_2] : memref<1x4x8x256xf32, #tpu.memory_space<vmem>>, vector<1x4x8x256xf32>
    %cst = arith.constant dense<0xFF800000> : vector<1x4x256xf32>
    %1 = vector.multi_reduction <maximumf>, %0, %cst [2] : vector<1x4x8x256xf32> to vector<1x4x256xf32>
    %c0_i32 = arith.constant 0 : i32
    %2 = arith.cmpi eq, %arg1, %c0_i32 : i32
    %3 = arith.extui %2 : i1 to i32
    %c0_i32_3 = arith.constant 0 : i32
    %4 = arith.cmpi ne, %3, %c0_i32_3 : i32
    scf.if %4 {
      %c0_8 = arith.constant 0 : index
      %c0_9 = arith.constant 0 : index
      %c0_10 = arith.constant 0 : index
      %11 = vector.load %arg8[%c0_8, %c0_9, %c0_10] : memref<1x4x256xf32, #tpu.memory_space<vmem>>, vector<1x4x256xf32>
      tpu.vector_store %arg8[%c0_8, %c0_9, %c0_10], %1 {strides = array<i32>} : memref<1x4x256xf32, #tpu.memory_space<vmem>>, vector<1x4x256xf32>,
    } else {
    }
    %c0_i32_4 = arith.constant 0 : i32
    %5 = arith.cmpi ne, %arg1, %c0_i32_4 : i32
    %6 = arith.extui %5 : i1 to i32
    %c0_i32_5 = arith.constant 0 : i32
    %7 = arith.cmpi ne, %6, %c0_i32_5 : i32
    scf.if %7 {
      %c0_8 = arith.constant 0 : index
      %c0_9 = arith.constant 0 : index
      %c0_10 = arith.constant 0 : index
      %11 = vector.load %arg8[%c0_8, %c0_9, %c0_10] : memref<1x4x256xf32, #tpu.memory_space<vmem>>, vector<1x4x256xf32>
      %12 = arith.maximumf %11, %1 : vector<1x4x256xf32>
      %c0_11 = arith.constant 0 : index
      %c0_12 = arith.constant 0 : index
      %c0_13 = arith.constant 0 : index
      %13 = vector.load %arg8[%c0_11, %c0_12, %c0_13] : memref<1x4x256xf32, #tpu.memory_space<vmem>>, vector<1x4x256xf32>
      tpu.vector_store %arg8[%c0_11, %c0_12, %c0_13], %12 {strides = array<i32>} : memref<1x4x256xf32, #tpu.memory_space<vmem>>, vector<1x4x256xf32>,
    } else {
    }
    %c0_i32_6 = arith.constant 0 : i32
    %8 = arith.cmpi eq, %arg1, %c0_i32_6 : i32
    %9 = arith.extui %8 : i1 to i32
    %c0_i32_7 = arith.constant 0 : i32
    %10 = arith.cmpi ne, %9, %c0_i32_7 : i32
    scf.if %10 {
      %c0_8 = arith.constant 0 : index
      %c0_9 = arith.constant 0 : index
      %11 = vector.load %arg3[%c0_8, %c0_9] : memref<8x4xf32, #tpu.memory_space<vmem>>, vector<8x4xf32>
      %c0_10 = arith.constant 0 : index
      %c0_11 = arith.constant 0 : index
      %12 = vector.load %arg4[%c0_10, %c0_11] : memref<1x256xf32, #tpu.memory_space<vmem>>, vector<1x256xf32>
      %c0_12 = arith.constant 0 : index
      %c0_13 = arith.constant 0 : index
      %13 = vector.load %arg5[%c0_12, %c0_13] : memref<256x3xf32, #tpu.memory_space<vmem>>, vector<256x3xf32>
      %c0_14 = arith.constant 0 : index
      %c0_15 = arith.constant 0 : index
      %14 = vector.load %arg6[%c0_14, %c0_15] : memref<1x3xf32, #tpu.memory_space<vmem>>, vector<1x3xf32>
      %c0_16 = arith.constant 0 : index
      %c0_17 = arith.constant 0 : index
      %c0_18 = arith.constant 0 : index
      %15 = vector.load %arg8[%c0_16, %c0_17, %c0_18] : memref<1x4x256xf32, #tpu.memory_space<vmem>>, vector<1x4x256xf32>
      %16 = vector.shape_cast %15 : vector<1x4x256xf32> to vector<4x256xf32>
      %cst_19 = arith.constant dense<0.000000e+00> : vector<8x256xf32>
      %17 = tpu.matmul %11, %16, %cst_19 {dimension_numbers = #tpu.dot_dimension_numbers<[1], [0], [0], [1], [0, 0, 1, 1], [], []>} : vector<8x4xf32>, vector<4x256xf32>, vector<8x256xf32> -> vector<8x256xf32>
      %cst_20 = arith.constant 9.99999997E-7 : f32
      %18 = vector.broadcast %cst_20 : f32 to vector<8x256xf32>
      %19 = arith.maximumf %17, %18 : vector<8x256xf32>
      %20 = math.log %19 : vector<8x256xf32>
      %21 = vector.broadcast %12 : vector<1x256xf32> to vector<8x256xf32>
      %22 = arith.mulf %20, %21 : vector<8x256xf32>
      %23 = math.exp %22 : vector<8x256xf32>
      %cst_21 = arith.constant dense<0.000000e+00> : vector<8x3xf32>
      %24 = tpu.matmul %23, %13, %cst_21 {dimension_numbers = #tpu.dot_dimension_numbers<[1], [0], [0], [1], [0, 0, 1, 1], [], []>} : vector<8x256xf32>, vector<256x3xf32>, vector<8x3xf32> -> vector<8x3xf32>
      %25 = vector.broadcast %14 : vector<1x3xf32> to vector<8x3xf32>
      %26 = math.powf %24, %25 : vector<8x3xf32>
      %27 = vector.shape_cast %26 : vector<8x3xf32> to vector<1x8x3xf32>
      %c0_22 = arith.constant 0 : index
      %c0_23 = arith.constant 0 : index
      %c0_24 = arith.constant 0 : index
      %28 = vector.load %arg7[%c0_22, %c0_23, %c0_24] : memref<1x8x3xf32, #tpu.memory_space<vmem>>, vector<1x8x3xf32>
      tpu.vector_store %arg7[%c0_22, %c0_23, %c0_24], %27 {strides = array<i32>} : memref<1x8x3xf32, #tpu.memory_space<vmem>>, vector<1x8x3xf32>,
    } else {
    }
    return
  }
  func.func @transform_0(%arg0: i32, %arg1: i32) -> (i32, i32, i32, i32) {
    %c0_i32 = arith.constant 0 : i32
    %c0_i32_0 = arith.constant 0 : i32
    %c0_i32_1 = arith.constant 0 : i32
    return %arg0, %c0_i32, %arg1, %c0_i32_0 : i32, i32, i32, i32
  }
  func.func @transform_1(%arg0: i32, %arg1: i32) -> (i32, i32) {
    %c0_i32 = arith.constant 0 : i32
    %c0_i32_0 = arith.constant 0 : i32
    %c0_i32_1 = arith.constant 0 : i32
    return %c0_i32, %c0_i32_0 : i32, i32
  }
  func.func @transform_2(%arg0: i32, %arg1: i32) -> (i32, i32) {
    %c0_i32 = arith.constant 0 : i32
    %c0_i32_0 = arith.constant 0 : i32
    %c0_i32_1 = arith.constant 0 : i32
    return %c0_i32, %c0_i32_0 : i32, i32
  }
  func.func @transform_3(%arg0: i32, %arg1: i32) -> (i32, i32) {
    %c0_i32 = arith.constant 0 : i32
    %c0_i32_0 = arith.constant 0 : i32
    %c0_i32_1 = arith.constant 0 : i32
    return %c0_i32, %c0_i32_0 : i32, i32
  }
  func.func @transform_4(%arg0: i32, %arg1: i32) -> (i32, i32) {
    %c0_i32 = arith.constant 0 : i32
    %c0_i32_0 = arith.constant 0 : i32
    %c0_i32_1 = arith.constant 0 : i32
    return %c0_i32, %c0_i32_0 : i32, i32
  }
  func.func @transform_5(%arg0: i32, %arg1: i32) -> (i32, i32, i32) {
    %c0_i32 = arith.constant 0 : i32
    %c0_i32_0 = arith.constant 0 : i32
    %c0_i32_1 = arith.constant 0 : i32
    return %arg0, %c0_i32, %c0_i32_0 : i32, i32, i32
  }
}

</mosaic_0001>

<llo_original>
// kernel: tpu_custom_call.1
$region0: #{tpu_custom_call.1}
  #allocation0 [shape = 'u32[]', space=smem, size = 0x4, offset = 0x4, fixed_abs, tag = 'smem constant byte address 0x4 - core index']
  #allocation1 [shape = 'u32[144,128]{1,0:T(1,128)}', space=vmem, size = 0x12000, scoped, tag = 'internal scratch']
  #allocation2 [shape = 'f32[1,4,256]{2,1,0:T(4,128)}', space=vmem, size = 0x1000, scoped, tag = 'scratch operand']
  %s0 = inlined_call_operand.vmem [shape: f32[2,4,8,256], index: 0, kind: input, shape index: {}]
  %s1 = inlined_call_operand.vmem [shape: f32[8,4], index: 1, kind: input, shape index: {}]
  %s2 = inlined_call_operand.vmem [shape: f32[1,256], index: 2, kind: input, shape index: {}]
  %s3 = inlined_call_operand.vmem [shape: f32[256,3], index: 3, kind: input, shape index: {}]
  %s4 = inlined_call_operand.vmem [shape: f32[1,3], index: 4, kind: input, shape index: {}]
  %s5 = inlined_call_operand.vmem [shape: f32[2,8,3], index: 5, kind: output, shape index: {}]
  %s6 = sld [smem:[#allocation0]]
  $region65: #{tpu_custom_call.1} parent=0
    _
  %s8 = ssub.s32 1, %s6
  %s9 = scalar_select 0, %s8, %s6
  loop: start=0, step=1, limit=4
  $region2: #{tpu_custom_call.1} parent=0 // loop_pre_header
    _
  $region3: #{tpu_custom_call.1} parent=0 // loop_header
    %s11 = sphi 0, %s15
    %p12 = scmp.ge.s32.totalorder %s11, 4
    %s18 = sphi 0, %s30
    %s19 = sphi 0, %s26
    %s20 = sphi 0, %s18
    %s21 = sphi 0, %s19
    %s22 = sphi 0, %s20
    %s23 = sphi 0, %s21
    %s35 = sphi 0, %s37
    %s38 = sphi 0, %s35
    %s39 = sphi 0, %s38
    %s55 = sphi 0, %s39
    %s59 = sphi 0, %s59
    %s61 = sphi 0, %s59
    %s62 = sphi 0, %s61
    %s76 = sphi 0, %s62
    %s80 = sphi 0, %s80
    %s82 = sphi 0, %s80
    %s83 = sphi 0, %s82
    %s97 = sphi 0, %s83
    %s101 = sphi 0, %s101
    %s103 = sphi 0, %s101
    %s104 = sphi 0, %s103
    %s118 = sphi 0, %s104
    %s122 = sphi 0, %s122
    %s124 = sphi 0, %s122
    %s125 = sphi 0, %s124
    %s139 = sphi 0, %s125
    %s145 = sphi 0, %s147
    %s148 = sphi 0, %s145
    %s149 = sphi 0, %s148
    %s165 = sphi 0, %s149
  $region4: #{tpu_custom_call.1} parent=0 // loop_header_branch
    %14 = sbr.rel (%p12) target = $region8
  $region5: #{tpu_custom_call.1} parent=0 // loop_body
    %s16 = ssub.s32 %s11, 1
    %s17 = ssub.s32 %s11, 2
    %s24 = sadd.s32 1, %s19
    %p25 = scmp.ge.s32.totalorder %s24, 1
    %s26 = scalar_select %p25, 0, %s24
    %s27 = sadd.s32 1, %s18
    %s28 = scalar_select %p25, %s27, %s18
    %p29 = scmp.ge.s32.totalorder %s28, 2
    %s30 = scalar_select %p29, 0, %s28
    %s31 = ssub.s32 %s18, %s30
    %s32 = ssub.s32 %s19, %s26
    %s33 = sor.u32 %s31, %s32
    %p34 = scmp.eq.s32.totalorder %s33, 0
    %s36 = sadd.s32 %s35, 1
    %s37 = scalar_select %p34, %s35, %s36
    %p40 = pneg %p34
    %p41 = scmp.eq.s32.totalorder %s11, 1
    %p42 = por %p40, %p41
    %p43 = scmp.ne.s32.totalorder %s35, %s38
    %p44 = scmp.eq.s32.totalorder %s11, 0
    %p45 = por %p43, %p44
    %p46 = scmp.ne.s32.totalorder %s35, %s38
    %p47 = scmp.eq.s32.totalorder %s16, 1
    %p48 = por %p46, %p47
    %p49 = scmp.ne.s32.totalorder %s38, %s39
    %p50 = scmp.eq.s32.totalorder %s16, 0
    %p51 = por %p49, %p50
    %p52 = scmp.ne.s32.totalorder %s38, %s39
    %p53 = scmp.eq.s32.totalorder %s17, 1
    %p54 = por %p52, %p53
    %p56 = scmp.ne.s32.totalorder %s39, %s55
    %p57 = scmp.eq.s32.totalorder %s17, 0
    %p58 = por %p56, %p57
    %s60 = sadd.s32 %s59, 1
    %p63 = scmp.eq.s32.totalorder %s11, 1
    %p64 = scmp.ne.s32.totalorder %s59, %s61
    %p65 = scmp.eq.s32.totalorder %s11, 0
    %p66 = por %p64, %p65
    %p67 = scmp.ne.s32.totalorder %s59, %s61
    %p68 = scmp.eq.s32.totalorder %s16, 1
    %p69 = por %p67, %p68
    %p70 = scmp.ne.s32.totalorder %s61, %s62
    %p71 = scmp.eq.s32.totalorder %s16, 0
    %p72 = por %p70, %p71
    %p73 = scmp.ne.s32.totalorder %s61, %s62
    %p74 = scmp.eq.s32.totalorder %s17, 1
    %p75 = por %p73, %p74
    %p77 = scmp.ne.s32.totalorder %s62, %s76
    %p78 = scmp.eq.s32.totalorder %s17, 0
    %p79 = por %p77, %p78
    %s81 = sadd.s32 %s80, 1
    %p84 = scmp.eq.s32.totalorder %s11, 1
    %p85 = scmp.ne.s32.totalorder %s80, %s82
    %p86 = scmp.eq.s32.totalorder %s11, 0
    %p87 = por %p85, %p86
    %p88 = scmp.ne.s32.totalorder %s80, %s82
    %p89 = scmp.eq.s32.totalorder %s16, 1
    %p90 = por %p88, %p89
    %p91 = scmp.ne.s32.totalorder %s82, %s83
    %p92 = scmp.eq.s32.totalorder %s16, 0
    %p93 = por %p91, %p92
    %p94 = scmp.ne.s32.totalorder %s82, %s83
    %p95 = scmp.eq.s32.totalorder %s17, 1
    %p96 = por %p94, %p95
    %p98 = scmp.ne.s32.totalorder %s83, %s97
    %p99 = scmp.eq.s32.totalorder %s17, 0
    %p100 = por %p98, %p99
    %s102 = sadd.s32 %s101, 1
    %p105 = scmp.eq.s32.totalorder %s11, 1
    %p106 = scmp.ne.s32.totalorder %s101, %s103
    %p107 = scmp.eq.s32.totalorder %s11, 0
    %p108 = por %p106, %p107
    %p109 = scmp.ne.s32.totalorder %s101, %s103
    %p110 = scmp.eq.s32.totalorder %s16, 1
    %p111 = por %p109, %p110
    %p112 = scmp.ne.s32.totalorder %s103, %s104
    %p113 = scmp.eq.s32.totalorder %s16, 0
    %p114 = por %p112, %p113
    %p115 = scmp.ne.s32.totalorder %s103, %s104
    %p116 = scmp.eq.s32.totalorder %s17, 1
    %p117 = por %p115, %p116
    %p119 = scmp.ne.s32.totalorder %s104, %s118
    %p120 = scmp.eq.s32.totalorder %s17, 0
    %p121 = por %p119, %p120
    %s123 = sadd.s32 %s122, 1
    %p126 = scmp.eq.s32.totalorder %s11, 1
    %p127 = scmp.ne.s32.totalorder %s122, %s124
    %p128 = scmp.eq.s32.totalorder %s11, 0
    %p129 = por %p127, %p128
    %p130 = scmp.ne.s32.totalorder %s122, %s124
    %p131 = scmp.eq.s32.totalorder %s16, 1
    %p132 = por %p130, %p131
    %p133 = scmp.ne.s32.totalorder %s124, %s125
    %p134 = scmp.eq.s32.totalorder %s16, 0
    %p135 = por %p133, %p134
    %p136 = scmp.ne.s32.totalorder %s124, %s125
    %p137 = scmp.eq.s32.totalorder %s17, 1
    %p138 = por %p136, %p137
    %p140 = scmp.ne.s32.totalorder %s125, %s139
    %p141 = scmp.eq.s32.totalorder %s17, 0
    %p142 = por %p140, %p141
    %s143 = ssub.s32 %s18, %s30
    %p144 = scmp.eq.s32.totalorder %s143, 0
    %s146 = sadd.s32 %s145, 1
    %s147 = scalar_select %p144, %s145, %s146
    %p150 = pneg %p144
    %p151 = scmp.eq.s32.totalorder %s11, 1
    %p152 = por %p150, %p151
    %p153 = scmp.ne.s32.totalorder %s145, %s148
    %p154 = scmp.eq.s32.totalorder %s11, 0
    %p155 = por %p153, %p154
    %p156 = scmp.ne.s32.totalorder %s145, %s148
    %p157 = scmp.eq.s32.totalorder %s16, 1
    %p158 = por %p156, %p157
    %p159 = scmp.ne.s32.totalorder %s148, %s149
    %p160 = scmp.eq.s32.totalorder %s16, 0
    %p161 = por %p159, %p160
    %p162 = scmp.ne.s32.totalorder %s148, %s149
    %p163 = scmp.eq.s32.totalorder %s17, 1
    %p164 = por %p162, %p163
    %p166 = scmp.ne.s32.totalorder %s149, %s165
    %p167 = scmp.eq.s32.totalorder %s17, 0
    %p168 = por %p166, %p167
    %p169 = scmp.le.s32.totalorder 1, %s11
    %p170 = scmp.lt.s32.totalorder %s11, 3
    %p171 = pnand %p169, %p170
    %p172 = pneg %p171
    // Predicated region
    $region9: #{tpu_custom_call.1} parent=5 // pred_check
      _
    $region10: #{tpu_custom_call.1} parent=5 // pred_check_branch
      %174 = sbr.rel (%p171) target = $region12
    $region11: #{tpu_custom_call.1} parent=5 // pred_region
      %s175 = ssub.s32 %s11, 1
      // Predicated region
      $region13: #{tpu_custom_call.1} parent=11 // pred_check
        %p176 = pneg %p72
      $region14: #{tpu_custom_call.1} parent=11 // pred_check_branch
        %178 = sbr.rel (%p176) target = $region16
      $region15: #{tpu_custom_call.1} parent=11 // pred_region
        _
      $region16: #{tpu_custom_call.1} parent=11 // pred_fallthru
        _
      // Predicated region
      $region17: #{tpu_custom_call.1} parent=11 // pred_check
        %p179 = pneg %p93
      $region18: #{tpu_custom_call.1} parent=11 // pred_check_branch
        %181 = sbr.rel (%p179) target = $region20
      $region19: #{tpu_custom_call.1} parent=11 // pred_region
        _
      $region20: #{tpu_custom_call.1} parent=11 // pred_fallthru
        _
      // Predicated region
      $region21: #{tpu_custom_call.1} parent=11 // pred_check
        %p182 = pneg %p114
      $region22: #{tpu_custom_call.1} parent=11 // pred_check_branch
        %184 = sbr.rel (%p182) target = $region24
      $region23: #{tpu_custom_call.1} parent=11 // pred_region
        _
      $region24: #{tpu_custom_call.1} parent=11 // pred_fallthru
        _
      // Predicated region
      $region25: #{tpu_custom_call.1} parent=11 // pred_check
        %p185 = pneg %p135
      $region26: #{tpu_custom_call.1} parent=11 // pred_check_branch
        %187 = sbr.rel (%p185) target = $region28
      $region27: #{tpu_custom_call.1} parent=11 // pred_region
        _
      $region28: #{tpu_custom_call.1} parent=11 // pred_fallthru
        _
    $region12: #{tpu_custom_call.1} parent=5 // pred_fallthru
      _
    %p188 = scmp.lt.s32.totalorder %s11, 2
    // Predicated region
    $region29: #{tpu_custom_call.1} parent=5 // pred_check
      %p189 = pneg %p188
    $region30: #{tpu_custom_call.1} parent=5 // pred_check_branch
      %191 = sbr.rel (%p189) target = $region32
    $region31: #{tpu_custom_call.1} parent=5 // pred_region
      // Predicated region
      $region33: #{tpu_custom_call.1} parent=31 // pred_check
        %p192 = pneg %p45
      $region34: #{tpu_custom_call.1} parent=31 // pred_check_branch
        %194 = sbr.rel (%p192) target = $region36
      $region35: #{tpu_custom_call.1} parent=31 // pred_region
        %p195 = scmp.lt.s32.totalorder %s18, 1
        %s196 = scalar_select %p195, %s18, 1
        %p197 = scmp.lt.s32.totalorder %s19, 0
        %s198 = scalar_select %p197, %s19, 0
        %s199 = smul.addr %s198, 2
        %s200 = smul.addr %s196, 8
        %s201 = sadd.s32 %s199, %s200
        %s202 = smul.addr %s201, 8
        %s203 = scalar_lea.vmem %s0, %s202
      $region36: #{tpu_custom_call.1} parent=31 // pred_fallthru
        _
    $region32: #{tpu_custom_call.1} parent=5 // pred_fallthru
      _
    %p204 = scmp.le.s32.totalorder 1, %s11
    %p205 = scmp.lt.s32.totalorder %s11, 3
    %p206 = pnand %p204, %p205
    %p207 = pneg %p206
    // Predicated region
    $region37: #{tpu_custom_call.1} parent=5 // pred_check
      _
    $region38: #{tpu_custom_call.1} parent=5 // pred_check_branch
      %209 = sbr.rel (%p206) target = $region40
    $region39: #{tpu_custom_call.1} parent=5 // pred_region
      %s210 = ssub.s32 %s11, 1
      %p211 = scmp.lt.s32.totalorder %s20, 1
      %s212 = scalar_select %p211, %s20, 1
      %p213 = scmp.lt.s32.totalorder %s21, 0
      %s214 = scalar_select %p213, %s21, 0
      %s215 = smul.addr %s214, 2
      %s216 = smul.addr %s212, 8
      %s217 = sadd.s32 %s215, %s216
      %s218 = smul.addr %s217, 8
      %s219 = scalar_lea.vmem %s0, %s218
      %p220 = pneg %p51
      %p221 = pneg %p48
      %p222 = pneg %p72
      %p223 = pneg %p69
      %p224 = pneg %p93
      %p225 = pneg %p90
      %p226 = pneg %p114
      %p227 = pneg %p111
      %p228 = pneg %p135
      %p229 = pneg %p132
      %p230 = pneg %p161
      %p231 = pneg %p158
      %p232 = scmp.lt.s32.totalorder %s20, 1
      %s233 = scalar_select %p232, %s20, 1
      %s234 = smul.addr %s233, 8
      %s235 = scalar_lea.vmem %s5, %s234
      %p236 = scmp.lt.s32.totalorder %s20, 1
      %s237 = scalar_select %p236, %s20, 1
      %p238 = scmp.lt.s32.totalorder %s21, 0
      %s239 = scalar_select %p238, %s21, 0
      %s240 = smul.addr %s239, 2
      %s241 = smul.addr %s237, 8
      %s242 = sadd.s32 %s240, %s241
      %s243 = smul.addr %s242, 8
      %s244 = scalar_lea.vmem %s0, %s243
      %p245 = scmp.lt.s32.totalorder %s20, 1
      %s246 = scalar_select %p245, %s20, 1
      %s247 = smul.addr %s246, 8
      %s248 = scalar_lea.vmem %s5, %s247
      %v249 = vld [vmem:[%s244] sm:$0xff]
      %v250 = vld [vmem:[%s244 + $0x8] sm:$0xff]
      %v251 = vld [vmem:[%s244 + $0x10] sm:$0xff]
      %v252 = vld [vmem:[%s244 + $0x18] sm:$0xff]
      %v253 = vld [vmem:[%s244 + $0x20] sm:$0xff]
      %v254 = vld [vmem:[%s244 + $0x28] sm:$0xff]
      %v255 = vld [vmem:[%s244 + $0x30] sm:$0xff]
      %v256 = vld [vmem:[%s244 + $0x38] sm:$0xff]
      %v257 = vrot.slane %v249, 4
      %v258 = vmax.f32 %v249, %v257
      %v259 = vrot.slane %v258, 2
      %v260 = vmax.f32 %v258, %v259
      %v261 = vrot.slane %v260, 1
      %v262 = vmax.f32 %v260, %v261
      %v263 = vrot.slane %v250, 4
      %v264 = vmax.f32 %v250, %v263
      %v265 = vrot.slane %v264, 2
      %v266 = vmax.f32 %v264, %v265
      %v267 = vrot.slane %v266, 1
      %v268 = vmax.f32 %v266, %v267
      %v269 = vrot.slane %v251, 4
      %v270 = vmax.f32 %v251, %v269
      %v271 = vrot.slane %v270, 2
      %v272 = vmax.f32 %v270, %v271
      %v273 = vrot.slane %v272, 1
      %v274 = vmax.f32 %v272, %v273
      %v275 = vrot.slane %v252, 4
      %v276 = vmax.f32 %v252, %v275
      %v277 = vrot.slane %v276, 2
      %v278 = vmax.f32 %v276, %v277
      %v279 = vrot.slane %v278, 1
      %v280 = vmax.f32 %v278, %v279
      %v281 = vrot.slane %v253, 4
      %v282 = vmax.f32 %v253, %v281
      %v283 = vrot.slane %v282, 2
      %v284 = vmax.f32 %v282, %v283
      %v285 = vrot.slane %v284, 1
      %v286 = vmax.f32 %v284, %v285
      %v287 = vrot.slane %v254, 4
      %v288 = vmax.f32 %v254, %v287
      %v289 = vrot.slane %v288, 2
      %v290 = vmax.f32 %v288, %v289
      %v291 = vrot.slane %v290, 1
      %v292 = vmax.f32 %v290, %v291
      %v293 = vrot.slane %v255, 4
      %v294 = vmax.f32 %v255, %v293
      %v295 = vrot.slane %v294, 2
      %v296 = vmax.f32 %v294, %v295
      %v297 = vrot.slane %v296, 1
      %v298 = vmax.f32 %v296, %v297
      %v299 = vrot.slane %v256, 4
      %v300 = vmax.f32 %v256, %v299
      %v301 = vrot.slane %v300, 2
      %v302 = vmax.f32 %v300, %v301
      %v303 = vrot.slane %v302, 1
      %v304 = vmax.f32 %v302, %v303
      %p305 = scmp.eq.s32.totalorder %s21, 0
      // Predicated region
      $region41: #{tpu_custom_call.1} parent=39 // pred_check
        %p306 = pneg %p305
      $region42: #{tpu_custom_call.1} parent=39 // pred_check_branch
        %308 = sbr.rel (%p306) target = $region44
      $region43: #{tpu_custom_call.1} parent=39 // pred_region
        %v317 = vcombine.low %v262, %v268
        %v318 = vcombine.low %v274, %v280
        %v319 = vcombine.low %v286, %v292
        %v320 = vcombine.low %v298, %v304
        %v321 = vrot.slane %v318, 7
        %vm322 = vcmask 1041409
        %v323 = vsel %vm322, %v321, %v317
        %vm324 = vcmask 1045509
        %v325 = vsel %vm324, %v321, %v323
        %v326 = vrot.slane %v319, 6
        %vm327 = vcmask 1042434
        %v328 = vsel %vm327, %v326, %v325
        %vm329 = vcmask 1046534
        %v330 = vsel %vm329, %v326, %v328
        %v331 = vrot.slane %v320, 5
        %vm332 = vcmask 1043459
        %v333 = vsel %vm332, %v331, %v330
        %vm334 = vcmask 1047559
        %v335 = vsel %vm334, %v331, %v333
        %337 = vst [vmem:[#allocation2] sm:$0xff] %v335
      $region44: #{tpu_custom_call.1} parent=39 // pred_fallthru
        _
      %p338 = scmp.ne.s32.totalorder %s21, 0
      // Predicated region
      $region45: #{tpu_custom_call.1} parent=39 // pred_check
        %p339 = pneg %p338
      $region46: #{tpu_custom_call.1} parent=39 // pred_check_branch
        %341 = sbr.rel (%p339) target = $region48
      $region47: #{tpu_custom_call.1} parent=39 // pred_region
        %v342 = vld [vmem:[#allocation2] sm:$0xff]
        %v351 = vcombine.low %v262, %v268
        %v352 = vcombine.low %v274, %v280
        %v353 = vcombine.low %v286, %v292
        %v354 = vcombine.low %v298, %v304
        %v355 = vrot.slane %v352, 7
        %vm356 = vcmask 1041409
        %v357 = vsel %vm356, %v355, %v351
        %vm358 = vcmask 1045509
        %v359 = vsel %vm358, %v355, %v357
        %v360 = vrot.slane %v353, 6
        %vm361 = vcmask 1042434
        %v362 = vsel %vm361, %v360, %v359
        %vm363 = vcmask 1046534
        %v364 = vsel %vm363, %v360, %v362
        %v365 = vrot.slane %v354, 5
        %vm366 = vcmask 1043459
        %v367 = vsel %vm366, %v365, %v364
        %vm368 = vcmask 1047559
        %v369 = vsel %vm368, %v365, %v367
        %v371 = vmax.f32 %v342, %v369
        %372 = vst [vmem:[#allocation2] sm:$0xff] %v371
      $region48: #{tpu_custom_call.1} parent=39 // pred_fallthru
        _
      // Predicated region
      $region49: #{tpu_custom_call.1} parent=39 // pred_check
        %p373 = pneg %p305
      $region50: #{tpu_custom_call.1} parent=39 // pred_check_branch
        %375 = sbr.rel (%p373) target = $region52
      $region51: #{tpu_custom_call.1} parent=39 // pred_region
        %v376 = vld [vmem:[%s1] sm:$0xff]
        %v377 = vld [vmem:[%s2] sm:$0x3]
        %v378 = vld [vmem:[%s3] sm:$0xff]
        %v379 = vld [vmem:[%s3 + $0x8] sm:$0xff]
        %v380 = vld [vmem:[%s3 + $0x10] sm:$0xff]
        %v381 = vld [vmem:[%s3 + $0x18] sm:$0xff]
        %v382 = vld [vmem:[%s3 + $0x20] sm:$0xff]
        %v383 = vld [vmem:[%s3 + $0x28] sm:$0xff]
        %v384 = vld [vmem:[%s3 + $0x30] sm:$0xff]
        %v385 = vld [vmem:[%s3 + $0x38] sm:$0xff]
        %v386 = vld [vmem:[%s3 + $0x40] sm:$0xff]
        %v387 = vld [vmem:[%s3 + $0x48] sm:$0xff]
        %v388 = vld [vmem:[%s3 + $0x50] sm:$0xff]
        %v389 = vld [vmem:[%s3 + $0x58] sm:$0xff]
        %v390 = vld [vmem:[%s3 + $0x60] sm:$0xff]
        %v391 = vld [vmem:[%s3 + $0x68] sm:$0xff]
        %v392 = vld [vmem:[%s3 + $0x70] sm:$0xff]
        %v393 = vld [vmem:[%s3 + $0x78] sm:$0xff]
        %v394 = vld [vmem:[%s3 + $0x80] sm:$0xff]
        %v395 = vld [vmem:[%s3 + $0x88] sm:$0xff]
        %v396 = vld [vmem:[%s3 + $0x90] sm:$0xff]
        %v397 = vld [vmem:[%s3 + $0x98] sm:$0xff]
        %v398 = vld [vmem:[%s3 + $0xa0] sm:$0xff]
        %v399 = vld [vmem:[%s3 + $0xa8] sm:$0xff]
        %v400 = vld [vmem:[%s3 + $0xb0] sm:$0xff]
        %v401 = vld [vmem:[%s3 + $0xb8] sm:$0xff]
        %v402 = vld [vmem:[%s3 + $0xc0] sm:$0xff]
        %v403 = vld [vmem:[%s3 + $0xc8] sm:$0xff]
        %v404 = vld [vmem:[%s3 + $0xd0] sm:$0xff]
        %v405 = vld [vmem:[%s3 + $0xd8] sm:$0xff]
        %v406 = vld [vmem:[%s3 + $0xe0] sm:$0xff]
        %v407 = vld [vmem:[%s3 + $0xe8] sm:$0xff]
        %v408 = vld [vmem:[%s3 + $0xf0] sm:$0xff]
        %v409 = vld [vmem:[%s3 + $0xf8] sm:$0xff]
        %v410 = vld [vmem:[%s4] sm:$0x1]
        %v411 = vld [vmem:[#allocation2] sm:$0xff]
        %v413 = vcombine.high %v411, %v411
        %vm414 = vcmask 31744
        %v416 = vsel %vm414, %v376, 0
        %vm418 = vcmask 1043456
        %v419 = vsel %vm418, %v411, 0
        %v421 = vsel %vm418, %v413, 0
        %423 = vmatprep.subr.mxu0 0.0
        %424 = vmatpush1.msra.mxu0 0.0
        %425 = vmatprep.subr.mxu0 0.0
        %426 = vmatpush1.msra.mxu0 0.0
        %427 = vmatprep.subr.mxu0 0.0
        %428 = vmatpush1.msra.mxu0 0.0
        %429 = vmatprep.subr.mxu0 0.0
        %430 = vmatpush1.msra.mxu0 0.0
        %431 = vmatprep.subr.mxu0 0.0
        %432 = vmatpush1.msra.mxu0 0.0
        %433 = vmatprep.subr.mxu0 0.0
        %434 = vmatpush1.msra.mxu0 0.0
        %435 = vmatprep.subr.mxu0 0.0
        %436 = vmatpush1.msra.mxu0 0.0
        %437 = vmatprep.subr.mxu0 0.0
        %438 = vmatpush1.msra.mxu0 0.0
        %439 = vmatprep.subr.mxu0 0.0
        %440 = vmatpush1.msra.mxu0 0.0
        %441 = vmatprep.subr.mxu0 0.0
        %442 = vmatpush1.msra.mxu0 0.0
        %443 = vmatprep.subr.mxu0 0.0
        %444 = vmatpush1.msra.mxu0 0.0
        %445 = vmatprep.subr.mxu0 0.0
        %446 = vmatpush1.msra.mxu0 0.0
        %447 = vmatprep.subr.mxu0 0.0
        %448 = vmatpush1.msra.mxu0 0.0
        %449 = vmatprep.subr.mxu0 0.0
        %450 = vmatpush1.msra.mxu0 0.0
        %451 = vmatprep.subr.mxu0 0.0
        %452 = vmatpush1.msra.mxu0 0.0
        %453 = vmatprep.subr.mxu0 %v421
        %454 = vmatpush1.msra.mxu0 %v419
        %455 = vmatprep.subr.mxu0 0.0
        %456 = vmatpush2.msra.mxu0 0.0
        %457 = vmatprep.subr.mxu0 0.0
        %458 = vmatpush2.msra.mxu0 0.0
        %459 = vmatprep.subr.mxu0 0.0
        %460 = vmatpush2.msra.mxu0 0.0
        %461 = vmatprep.subr.mxu0 0.0
        %462 = vmatpush2.msra.mxu0 0.0
        %463 = vmatprep.subr.mxu0 0.0
        %464 = vmatpush2.msra.mxu0 0.0
        %465 = vmatprep.subr.mxu0 0.0
        %466 = vmatpush2.msra.mxu0 0.0
        %467 = vmatprep.subr.mxu0 0.0
        %468 = vmatpush2.msra.mxu0 0.0
        %469 = vmatprep.subr.mxu0 0.0
        %470 = vmatpush2.msra.mxu0 0.0
        %471 = vmatprep.subr.mxu0 0.0
        %472 = vmatpush2.msra.mxu0 0.0
        %473 = vmatprep.subr.mxu0 0.0
        %474 = vmatpush2.msra.mxu0 0.0
        %475 = vmatprep.subr.mxu0 0.0
        %476 = vmatpush2.msra.mxu0 0.0
        %477 = vmatprep.subr.mxu0 0.0
        %478 = vmatpush2.msra.mxu0 0.0
        %479 = vmatprep.subr.mxu0 0.0
        %480 = vmatpush2.msra.mxu0 0.0
        %481 = vmatprep.subr.mxu0 0.0
        %482 = vmatpush2.msra.mxu0 0.0
        %483 = vmatprep.subr.mxu0 0.0
        %484 = vmatpush2.msra.mxu0 0.0
        %485 = vmatprep.subr.mxu0 0.0
        %486 = vmatpush2.msra.mxu0 0.0
        %487 = vmatprep.mubr.f32.mxu0 0.0
        %488 = vmatmul.mubr.f32.gmra.mxu0 %v416
        %v489 = vpop.f32.mrf.mxu0
        %v490 = vadd.f32 0.0, %v489
        %v491 = vpop.f32.mrf.mxu0
        %v492 = vadd.f32 0.0, %v491
        %493 = vdwg.mxu0
        %v494 = vmax.f32 %v490, 1e-06
        %v495 = vmax.f32 %v492, 1e-06
        %v496 = vlog2.pop %v494
        %v497 = vmul.f32 %v496, 0.6931472
        %v498 = vlog2.pop %v495
        %v499 = vmul.f32 %v498, 0.6931472
        %v501 = vlaneseq
        %v502 = vshrl.u32 %v501, 7
        %v503 = vsub.s32 0, %v502
        %v504 = vrot.slane %v377, %v503
        %v505 = vlaneseq
        %v506 = vshrl.u32 %v505, 7
        %v507 = vsub.s32 1, %v506
        %v508 = vrot.slane %v377, %v507
        %v511 = vmul.f32 %v497, %v504
        %v512 = vmul.f32 %v499, %v508
        %v513 = vmul.f32 %v511, 1.442695
        %v514 = vpow.pop %v513
        %v515 = vmul.f32 %v512, 1.442695
        %v516 = vpow.pop %v515
        %517 = vmatprep.subr.mxu0 0.0
        %518 = vmatpush1.msra.mxu0 %v393
        %519 = vmatprep.subr.mxu0 0.0
        %520 = vmatpush1.msra.mxu0 %v392
        %521 = vmatprep.subr.mxu0 0.0
        %522 = vmatpush1.msra.mxu0 %v391
        %523 = vmatprep.subr.mxu0 0.0
        %524 = vmatpush1.msra.mxu0 %v390
        %525 = vmatprep.subr.mxu0 0.0
        %526 = vmatpush1.msra.mxu0 %v389
        %527 = vmatprep.subr.mxu0 0.0
        %528 = vmatpush1.msra.mxu0 %v388
        %529 = vmatprep.subr.mxu0 0.0
        %530 = vmatpush1.msra.mxu0 %v387
        %531 = vmatprep.subr.mxu0 0.0
        %532 = vmatpush1.msra.mxu0 %v386
        %533 = vmatprep.subr.mxu0 0.0
        %534 = vmatpush1.msra.mxu0 %v385
        %535 = vmatprep.subr.mxu0 0.0
        %536 = vmatpush1.msra.mxu0 %v384
        %537 = vmatprep.subr.mxu0 0.0
        %538 = vmatpush1.msra.mxu0 %v383
        %539 = vmatprep.subr.mxu0 0.0
        %540 = vmatpush1.msra.mxu0 %v382
        %541 = vmatprep.subr.mxu0 0.0
        %542 = vmatpush1.msra.mxu0 %v381
        %543 = vmatprep.subr.mxu0 0.0
        %544 = vmatpush1.msra.mxu0 %v380
        %545 = vmatprep.subr.mxu0 0.0
        %546 = vmatpush1.msra.mxu0 %v379
        %547 = vmatprep.subr.mxu0 0.0
        %548 = vmatpush1.msra.mxu0 %v378
        %549 = vmatprep.subr.mxu0 0.0
        %550 = vmatpush2.msra.mxu0 %v409
        %551 = vmatprep.subr.mxu0 0.0
        %552 = vmatpush2.msra.mxu0 %v408
        %553 = vmatprep.subr.mxu0 0.0
        %554 = vmatpush2.msra.mxu0 %v407
        %555 = vmatprep.subr.mxu0 0.0
        %556 = vmatpush2.msra.mxu0 %v406
        %557 = vmatprep.subr.mxu0 0.0
        %558 = vmatpush2.msra.mxu0 %v405
        %559 = vmatprep.subr.mxu0 0.0
        %560 = vmatpush2.msra.mxu0 %v404
        %561 = vmatprep.subr.mxu0 0.0
        %562 = vmatpush2.msra.mxu0 %v403
        %563 = vmatprep.subr.mxu0 0.0
        %564 = vmatpush2.msra.mxu0 %v402
        %565 = vmatprep.subr.mxu0 0.0
        %566 = vmatpush2.msra.mxu0 %v401
        %567 = vmatprep.subr.mxu0 0.0
        %568 = vmatpush2.msra.mxu0 %v400
        %569 = vmatprep.subr.mxu0 0.0
        %570 = vmatpush2.msra.mxu0 %v399
        %571 = vmatprep.subr.mxu0 0.0
        %572 = vmatpush2.msra.mxu0 %v398
        %573 = vmatprep.subr.mxu0 0.0
        %574 = vmatpush2.msra.mxu0 %v397
        %575 = vmatprep.subr.mxu0 0.0
        %576 = vmatpush2.msra.mxu0 %v396
        %577 = vmatprep.subr.mxu0 0.0
        %578 = vmatpush2.msra.mxu0 %v395
        %579 = vmatprep.subr.mxu0 0.0
        %580 = vmatpush2.msra.mxu0 %v394
        %581 = vmatprep.mubr.f32.mxu0 %v516
        %582 = vmatmul.mubr.f32.gmra.mxu0 %v514
        %v583 = vpop.f32.mrf.mxu0
        %v584 = vadd.f32 0.0, %v583
        %v585 = vpop.f32.mrf.mxu0
        %586 = vdwg.mxu0
        %v588 = vlaneseq
        %v589 = vshrl.u32 %v588, 7
        %v590 = vsub.s32 0, %v589
        %v591 = vrot.slane %v410, %v590
        %v593 = vpow.f32 %v584, %v591
        %vm594 = vcmask 23552
        %595 = vst.msk [vmem:[%s248] sm:$0xff] %vm594, %v593
      $region52: #{tpu_custom_call.1} parent=39 // pred_fallthru
        _
      %p596 = scmp.lt.s32.totalorder %s20, 1
      %s597 = scalar_select %p596, %s20, 1
      %s598 = smul.addr %s597, 8
      %s599 = scalar_lea.vmem %s5, %s598
      // Predicated region
      $region53: #{tpu_custom_call.1} parent=39 // pred_check
        %p600 = pneg %p158
      $region54: #{tpu_custom_call.1} parent=39 // pred_check_branch
        %602 = sbr.rel (%p600) target = $region56
      $region55: #{tpu_custom_call.1} parent=39 // pred_region
        _
      $region56: #{tpu_custom_call.1} parent=39 // pred_fallthru
        _
    $region40: #{tpu_custom_call.1} parent=5 // pred_fallthru
      _
    %p603 = scmp.le.s32.totalorder 2, %s11
    // Predicated region
    $region57: #{tpu_custom_call.1} parent=5 // pred_check
      %p604 = pneg %p603
    $region58: #{tpu_custom_call.1} parent=5 // pred_check_branch
      %606 = sbr.rel (%p604) target = $region60
    $region59: #{tpu_custom_call.1} parent=5 // pred_region
      %s607 = ssub.s32 %s11, 2
      // Predicated region
      $region61: #{tpu_custom_call.1} parent=59 // pred_check
        %p608 = pneg %p164
      $region62: #{tpu_custom_call.1} parent=59 // pred_check_branch
        %610 = sbr.rel (%p608) target = $region64
      $region63: #{tpu_custom_call.1} parent=59 // pred_region
        %p611 = scmp.lt.s32.totalorder %s22, 1
        %s612 = scalar_select %p611, %s22, 1
        %s613 = smul.addr %s612, 8
        %s614 = scalar_lea.vmem %s5, %s613
      $region64: #{tpu_custom_call.1} parent=59 // pred_fallthru
        _
    $region60: #{tpu_custom_call.1} parent=5 // pred_fallthru
      _
  $region6: #{tpu_custom_call.1} parent=0 // loop_footer
    %s15 = sadd.s32 1, %s11
  $region7: #{tpu_custom_call.1} parent=0 // loop_footer_branch
    %10 = sbr.rel target = $region3
  $region8: #{tpu_custom_call.1} parent=0 // loop_exit
    _

</llo_original>
